<compile_context>
chip_gen: v5e
topology: v5e:2x2
jax: 0.10.0
libtpu: 0.0.40
codegen_flags: <defaults>
</compile_context>

<pallas_src>
import functools

import jax
import jax.numpy as jnp
from jax.experimental import pallas as pl
from jax.experimental.pallas import tpu as pltpu


def _layernorm_kernel(x_ref, g_ref, o_ref, *, eps, stable):
    # x_ref: (tm, D) tile of rows, g_ref: (1, D) gain, o_ref: (tm, D) output.
    x = x_ref[...].astype(jnp.float32)

    if stable:
        # matches: x = x / x.amax(dim=-1, keepdim=True)  (detach is a fwd no-op)
        amax = jnp.max(x, axis=-1, keepdims=True)
        x = x * pl.reciprocal(amax, approx=False)  # EUP slot, VPU stays free

    mean = jnp.mean(x, axis=-1, keepdims=True)
    # population variance (unbiased=False); two-pass form for parity with torch
    var = jnp.mean(jnp.square(x - mean), axis=-1, keepdims=True)
    inv = jax.lax.rsqrt(var + eps)  # EUP

    g = g_ref[...].astype(jnp.float32)  # (1, D), broadcasts over rows
    y = (x - mean) * inv * g
    o_ref[...] = y.astype(o_ref.dtype)


def _round_up(n, m):
    return ((n + m - 1) // m) * m


def _pick_row_tile(R, D, itemsize, block_rows=None):
    """Choose the row-tile size tm (static Python ints only)."""
    # Sublane pack per dtype width (f32->8, bf16->16, int8/fp8->32).
    pack = {4: 8, 2: 16, 1: 32}.get(itemsize, 8)

    if block_rows is None:
        # Per-row VMEM working set:
        #   2x input double-buffer + 2x output double-buffer (input dtype)
        #   + ~3 live f32 temporaries (x_f32, x-mean, y) inside the body.
        # Keep the total under ~10 MiB so it fits the smallest default scoped
        # VMEM (v5e: 16 MiB) with headroom; v6e (32/128 MiB) and v7x (32/64
        # MiB) are strictly easier.  No compiler VMEM override needed.
        budget_bytes = 10 * 1024 * 1024
        per_row_bytes = 4 * D * itemsize + 3 * D * 4
        tm = max(pack, budget_bytes // per_row_bytes)
        # >=512 rows already sits at ~85% of HBM roofline; beyond 1024 the
        # extra VMEM pressure buys nothing for a streaming kernel.
        tm = min(tm, 1024)
    else:
        tm = max(pack, int(block_rows))

    # Align to the sublane pack (full-width loads/stores, and satisfies the
    # divisible-by-8 rule for the second-to-last block dim).
    tm = max(pack, (tm // pack) * pack)

    # Prefer >= 2 grid steps so v7x's two TensorCores both get work.
    half = max(pack, _round_up(pl.cdiv(R, 2), pack))
    tm = min(tm, half)

    # Single block covering all rows: block dim equal to the full array extent
    # is legal even when R is not a multiple of 8.
    if tm >= R:
        tm = R
    return tm


def layernorm_pallas(x, g, *, stable=False, block_rows=None):
    """LayerNorm over the last axis. x: (..., D), g: (D,)."""
    orig_shape = x.shape
    D = orig_shape[-1]
    assert g.shape == (D,), f"g must have shape ({D},), got {g.shape}"

    x2 = x.reshape(-1, D)          # collapse leading dims (metadata-only)
    R = x2.shape[0]

    # eps selection mirrors the torch module (fp32 -> 1e-5, else 1e-3)
    eps = 1e-5 if x.dtype == jnp.float32 else 1e-3

    itemsize = jnp.dtype(x.dtype).itemsize
    tm = _pick_row_tile(R, D, itemsize, block_rows)

    g2 = g.reshape(1, D)
    kernel = functools.partial(_layernorm_kernel, eps=eps, stable=stable)

    out = pl.pallas_call(
        kernel,
        out_shape=jax.ShapeDtypeStruct((R, D), x.dtype),
        grid_spec=pltpu.PrefetchScalarGridSpec(
            num_scalar_prefetch=0,
            grid=(pl.cdiv(R, tm),),            # partial edge block is masked
            in_specs=[
                pl.BlockSpec((tm, D), lambda i: (i, 0)),   # x row tile
                pl.BlockSpec((1, D), lambda i: (0, 0)),    # g (resident)
            ],
            out_specs=pl.BlockSpec((tm, D), lambda i: (i, 0)),
        ),
        compiler_params=pltpu.CompilerParams(
            dimension_semantics=("parallel",)
        ),
        cost_estimate=pl.CostEstimate(
            flops=8 * R * D,
            transcendentals=2 * R,
            bytes_accessed=2 * R * D * itemsize + D * itemsize,
        ),
    )(x2, g2)

    return out.reshape(orig_shape)


def layernorm_ref(x, g, *, stable=False):
    """Pure-JAX reference mirroring the PyTorch forward."""
    xf = x.astype(jnp.float32)
    if stable:
        xf = xf / jnp.max(xf, axis=-1, keepdims=True)
    eps = 1e-5 if x.dtype == jnp.float32 else 1e-3
    mean = jnp.mean(xf, axis=-1, keepdims=True)
    var = jnp.mean(jnp.square(xf - mean), axis=-1, keepdims=True)
    y = (xf - mean) * jax.lax.rsqrt(var + eps) * g.astype(jnp.float32)
    return y.astype(x.dtype)


if __name__ == "__main__":
    # Small shapes consistent with attention usage: batch=2, seq=8, hidden=32.
    B, N, D = 2, 8, 32
    key = jax.random.PRNGKey(0)
    x = jax.random.normal(key, (B, N, D), dtype=jnp.float32)

    # Deterministic parameter init: module initializes g = ones(feats).
    g = jnp.ones((D,), dtype=jnp.float32)

    out = jax.block_until_ready(layernorm_pallas(x, g, stable=False))
    ref = layernorm_ref(x, g, stable=False)
    assert out.shape == x.shape and out.dtype == x.dtype
    assert jnp.allclose(out, ref, atol=1e-5, rtol=1e-5), "mismatch vs reference"

    # Exercise the stable=True branch.
    out_s = jax.block_until_ready(layernorm_pallas(x, g, stable=True))
    ref_s = layernorm_ref(x, g, stable=True)
    assert jnp.allclose(out_s, ref_s, atol=1e-5, rtol=1e-5), "stable mismatch"

    # Exercise a non-tile-aligned row count (hits the masked partial edge block)
    # with an explicit small tile so the edge path is actually taken.
    x_odd = jax.random.normal(jax.random.PRNGKey(1), (3, 7, D), dtype=jnp.float32)
    out_odd = jax.block_until_ready(
        layernorm_pallas(x_odd, g, stable=False, block_rows=16))
    assert jnp.allclose(out_odd, layernorm_ref(x_odd, g), atol=1e-5, rtol=1e-5), \
        "edge-block mismatch"

    # Exercise the bf16 (eps=1e-3) path.
    x_bf = x.astype(jnp.bfloat16)
    out_bf = jax.block_until_ready(layernorm_pallas(x_bf, g.astype(jnp.bfloat16)))
    ref_bf = layernorm_ref(x_bf, g.astype(jnp.bfloat16))
    assert jnp.allclose(out_bf.astype(jnp.float32), ref_bf.astype(jnp.float32),
                        atol=2e-2, rtol=2e-2), "bf16 mismatch"

    print("KERNEL_OK")
</pallas_src>

<mosaic_0001>
module attributes {stable_mosaic.version = 11 : i64} {
  func.func @_layernorm_kernel(%arg0: i32, %arg1: memref<8x32xf32, #tpu.memory_space<vmem>>, %arg2: memref<1x32xf32, #tpu.memory_space<vmem>>, %arg3: memref<8x32xf32, #tpu.memory_space<vmem>>) attributes {dimension_semantics = [#tpu.dimension_semantics<parallel>], iteration_bounds = array<i64: 2>, scalar_prefetch = 0 : i64, scratch_operands = 0 : i64, tpu.core_type = #tpu.core_type<tc>, window_params = [{transform_indices = @transform_0, window_bounds = array<i64: 8, 32>}, {pipeline_mode = #tpu.pipeline_mode<synchronous>, transform_indices = @transform_1, window_bounds = array<i64: 1, 32>}, {transform_indices = @transform_2, window_bounds = array<i64: 8, 32>}]} {
    %c0 = arith.constant 0 : index
    %c0_0 = arith.constant 0 : index
    %0 = vector.load %arg1[%c0, %c0_0] : memref<8x32xf32, #tpu.memory_space<vmem>>, vector<8x32xf32>
    %cst = arith.constant dense<0.000000e+00> : vector<8xf32>
    %1 = vector.multi_reduction <add>, %0, %cst [1] : vector<8x32xf32> to vector<8xf32>
    %2 = vector.shape_cast %1 : vector<8xf32> to vector<8x1xf32>
    %cst_1 = arith.constant 3.200000e+01 : f32
    %3 = vector.broadcast %cst_1 : f32 to vector<8x1xf32>
    %4 = arith.divf %2, %3 : vector<8x1xf32>
    %5 = vector.broadcast %4 : vector<8x1xf32> to vector<8x32xf32>
    %6 = arith.subf %0, %5 : vector<8x32xf32>
    %7 = arith.mulf %6, %6 : vector<8x32xf32>
    %cst_2 = arith.constant dense<0.000000e+00> : vector<8xf32>
    %8 = vector.multi_reduction <add>, %7, %cst_2 [1] : vector<8x32xf32> to vector<8xf32>
    %9 = vector.shape_cast %8 : vector<8xf32> to vector<8x1xf32>
    %cst_3 = arith.constant 3.200000e+01 : f32
    %10 = vector.broadcast %cst_3 : f32 to vector<8x1xf32>
    %11 = arith.divf %9, %10 : vector<8x1xf32>
    %cst_4 = arith.constant 9.99999974E-6 : f32
    %12 = vector.broadcast %cst_4 : f32 to vector<8x1xf32>
    %13 = arith.addf %11, %12 : vector<8x1xf32>
    %14 = math.rsqrt %13 : vector<8x1xf32>
    %c0_5 = arith.constant 0 : index
    %c0_6 = arith.constant 0 : index
    %15 = vector.load %arg2[%c0_5, %c0_6] : memref<1x32xf32, #tpu.memory_space<vmem>>, vector<1x32xf32>
    %16 = vector.broadcast %4 : vector<8x1xf32> to vector<8x32xf32>
    %17 = arith.subf %0, %16 : vector<8x32xf32>
    %18 = vector.broadcast %14 : vector<8x1xf32> to vector<8x32xf32>
    %19 = arith.mulf %17, %18 : vector<8x32xf32>
    %20 = vector.broadcast %15 : vector<1x32xf32> to vector<8x32xf32>
    %21 = arith.mulf %19, %20 : vector<8x32xf32>
    %c0_7 = arith.constant 0 : index
    %c0_8 = arith.constant 0 : index
    %22 = vector.load %arg3[%c0_7, %c0_8] : memref<8x32xf32, #tpu.memory_space<vmem>>, vector<8x32xf32>
    tpu.vector_store %arg3[%c0_7, %c0_8], %21 {strides = array<i32>} : memref<8x32xf32, #tpu.memory_space<vmem>>, vector<8x32xf32>,
    return
  }
  func.func @transform_0(%arg0: i32) -> (i32, i32) {
    %c0_i32 = arith.constant 0 : i32
    %c0_i32_0 = arith.constant 0 : i32
    return %arg0, %c0_i32 : i32, i32
  }
  func.func @transform_1(%arg0: i32) -> (i32, i32) {
    %c0_i32 = arith.constant 0 : i32
    %c0_i32_0 = arith.constant 0 : i32
    %c0_i32_1 = arith.constant 0 : i32
    return %c0_i32, %c0_i32_0 : i32, i32
  }
  func.func @transform_2(%arg0: i32) -> (i32, i32) {
    %c0_i32 = arith.constant 0 : i32
    %c0_i32_0 = arith.constant 0 : i32
    return %arg0, %c0_i32 : i32, i32
  }
}

</mosaic_0001>

<llo_original>
// kernel: tpu_custom_call.1
$region0: #{tpu_custom_call.1}
  #allocation0 [shape = 'u32[]', space=smem, size = 0x4, offset = 0x4, fixed_abs, tag = 'smem constant byte address 0x4 - core index']
  #allocation1 [shape = 'u32[72,128]{1,0:T(1,128)}', space=vmem, size = 0x9000, scoped, tag = 'internal scratch']
  %s0 = inlined_call_operand.hbm [shape: f32[16,32], index: 0, kind: input, shape index: {}]
  %s1 = inlined_call_operand.hbm [shape: f32[1,32], index: 1, kind: input, shape index: {}]
  %s2 = inlined_call_operand.hbm [shape: f32[16,32], index: 2, kind: output, shape index: {}]
  %s3 = sld [smem:[#allocation0]]
  $region49: #{tpu_custom_call.1} parent=0
    _
  %s5 = ssub.s32 1, %s3
  %s6 = scalar_select 0, %s5, %s3
  $region1: #{tpu_custom_call.1} parent=0
    #allocation2 [shape = 'u8[8192]{0}', space=vmem, size = 0x2000, scoped, tag = 'input window, operand 0']
    #allocation3 [shape = 's32[2]{0}', space=sflag, size = 0x8, scoped, tag = 'scoped memory for tpu_custom_call.1']
    #allocation4 [shape = 's32[2]{0}', space=sflag, size = 0x8, scoped, tag = 'scoped memory for tpu_custom_call.1']
    #allocation5 [shape = 'u8[512]{0}', space=vmem, size = 0x400, scoped, tag = 'input window, operand 1, single buffered']
    #allocation6 [shape = 's32[1]{0}', space=sflag, size = 0x4, scoped, tag = 'scoped memory for tpu_custom_call.1']
    #allocation7 [shape = 'u8[8192]{0}', space=vmem, size = 0x2000, scoped, tag = 'output window, operand 0']
    %7 = vsyncpa [#allocation3], 0
    %s8 = scalar_lea.sflag [#allocation3], 1
    %9 = vsyncpa %s8, 0
    %10 = vsyncpa [#allocation6], 0
    %11 = vsyncpa [#allocation4], 0
    %s12 = scalar_lea.sflag [#allocation4], 1
    %13 = vsyncpa %s12, 0
    loop: start=0, step=1, limit=4
    $region2: #{tpu_custom_call.1} parent=1 // loop_pre_header
      _
    $region3: #{tpu_custom_call.1} parent=1 // loop_header
      %s15 = sphi 0, %s19
      %p16 = scmp.ge.s32.totalorder %s15, 4
      %s25 = sphi 0, %s27
      %s28 = sphi 0, %s25
      %s29 = sphi 0, %s28
      %s45 = sphi 0, %s29
      %s49 = sphi 0, %s49
      %s51 = sphi 0, %s49
      %s52 = sphi 0, %s51
      %s66 = sphi 0, %s52
      %s72 = sphi 0, %s74
      %s75 = sphi 0, %s72
      %s76 = sphi 0, %s75
      %s92 = sphi 0, %s76
    $region4: #{tpu_custom_call.1} parent=1 // loop_header_branch
      %18 = sbr.rel (%p16) target = $region8
    $region5: #{tpu_custom_call.1} parent=1 // loop_body
      %s20 = ssub.s32 %s15, 1
      %s21 = ssub.s32 %s15, 2
      %s22 = sadd.s32 %s15, 1
      %s23 = ssub.s32 %s15, %s22
      %p24 = scmp.eq.s32.totalorder %s23, 0
      %s26 = sadd.s32 %s25, 1
      %s27 = scalar_select %p24, %s25, %s26
      %p30 = pneg %p24
      %p31 = scmp.eq.s32.totalorder %s15, 1
      %p32 = por %p30, %p31
      %p33 = scmp.ne.s32.totalorder %s25, %s28
      %p34 = scmp.eq.s32.totalorder %s15, 0
      %p35 = por %p33, %p34
      %p36 = scmp.ne.s32.totalorder %s25, %s28
      %p37 = scmp.eq.s32.totalorder %s20, 1
      %p38 = por %p36, %p37
      %p39 = scmp.ne.s32.totalorder %s28, %s29
      %p40 = scmp.eq.s32.totalorder %s20, 0
      %p41 = por %p39, %p40
      %p42 = scmp.ne.s32.totalorder %s28, %s29
      %p43 = scmp.eq.s32.totalorder %s21, 1
      %p44 = por %p42, %p43
      %p46 = scmp.ne.s32.totalorder %s29, %s45
      %p47 = scmp.eq.s32.totalorder %s21, 0
      %p48 = por %p46, %p47
      %s50 = sadd.s32 %s49, 1
      %p53 = scmp.eq.s32.totalorder %s15, 1
      %p54 = scmp.ne.s32.totalorder %s49, %s51
      %p55 = scmp.eq.s32.totalorder %s15, 0
      %p56 = por %p54, %p55
      %p57 = scmp.ne.s32.totalorder %s49, %s51
      %p58 = scmp.eq.s32.totalorder %s20, 1
      %p59 = por %p57, %p58
      %p60 = scmp.ne.s32.totalorder %s51, %s52
      %p61 = scmp.eq.s32.totalorder %s20, 0
      %p62 = por %p60, %p61
      %p63 = scmp.ne.s32.totalorder %s51, %s52
      %p64 = scmp.eq.s32.totalorder %s21, 1
      %p65 = por %p63, %p64
      %p67 = scmp.ne.s32.totalorder %s52, %s66
      %p68 = scmp.eq.s32.totalorder %s21, 0
      %p69 = por %p67, %p68
      %s70 = ssub.s32 %s15, %s22
      %p71 = scmp.eq.s32.totalorder %s70, 0
      %s73 = sadd.s32 %s72, 1
      %s74 = scalar_select %p71, %s72, %s73
      %p77 = pneg %p71
      %p78 = scmp.eq.s32.totalorder %s15, 1
      %p79 = por %p77, %p78
      %p80 = scmp.ne.s32.totalorder %s72, %s75
      %p81 = scmp.eq.s32.totalorder %s15, 0
      %p82 = por %p80, %p81
      %p83 = scmp.ne.s32.totalorder %s72, %s75
      %p84 = scmp.eq.s32.totalorder %s20, 1
      %p85 = por %p83, %p84
      %p86 = scmp.ne.s32.totalorder %s75, %s76
      %p87 = scmp.eq.s32.totalorder %s20, 0
      %p88 = por %p86, %p87
      %p89 = scmp.ne.s32.totalorder %s75, %s76
      %p90 = scmp.eq.s32.totalorder %s21, 1
      %p91 = por %p89, %p90
      %p93 = scmp.ne.s32.totalorder %s76, %s92
      %p94 = scmp.eq.s32.totalorder %s21, 0
      %p95 = por %p93, %p94
      %p96 = scmp.le.s32.totalorder 1, %s15
      %p97 = scmp.lt.s32.totalorder %s15, 3
      %p98 = pnand %p96, %p97
      %p99 = pneg %p98
      // Predicated region
      $region9: #{tpu_custom_call.1} parent=5 // pred_check
        _
      $region10: #{tpu_custom_call.1} parent=5 // pred_check_branch
        %101 = sbr.rel (%p98) target = $region12
      $region11: #{tpu_custom_call.1} parent=5 // pred_region
        %s102 = ssub.s32 %s15, 1
        // Predicated region
        $region13: #{tpu_custom_call.1} parent=11 // pred_check
          %p103 = pneg %p62
        $region14: #{tpu_custom_call.1} parent=11 // pred_check_branch
          %105 = sbr.rel (%p103) target = $region16
        $region15: #{tpu_custom_call.1} parent=11 // pred_region
          %107 = vsyncadd [#allocation6], 0
          %s109 = sshll.u32 %s1, 4
          %s110 = int_to_ptr.hbm [resolvable:$true] %s109
          %s111 = sshll.u32 [#allocation5], 4
          %s112 = int_to_ptr.vmem [resolvable:$true] %s111
          %114 = dma.hbm_to_vmem [thread:$0]  %s110, 16, %s112, [#allocation6]
        $region16: #{tpu_custom_call.1} parent=11 // pred_fallthru
          _
      $region12: #{tpu_custom_call.1} parent=5 // pred_fallthru
        _
      %p115 = scmp.lt.s32.totalorder %s15, 2
      // Predicated region
      $region17: #{tpu_custom_call.1} parent=5 // pred_check
        %p116 = pneg %p115
      $region18: #{tpu_custom_call.1} parent=5 // pred_check_branch
        %118 = sbr.rel (%p116) target = $region20
      $region19: #{tpu_custom_call.1} parent=5 // pred_region
        // Predicated region
        $region21: #{tpu_custom_call.1} parent=19 // pred_check
          %p119 = pneg %p35
        $region22: #{tpu_custom_call.1} parent=19 // pred_check_branch
          %121 = sbr.rel (%p119) target = $region24
        $region23: #{tpu_custom_call.1} parent=19 // pred_region
          %s122 = sand.u32 %s25, 1
          %s123 = scalar_lea.sflag [#allocation3], %s122
          %s124 = sand.u32 %s25, 1
          %s125 = smul.addr %s124, 8
          %s126 = scalar_lea.vmem [#allocation2], %s125
          %128 = vsyncadd %s123, 0
          %s129 = smul.addr %s15, 8
          %s130 = scalar_lea.hbm %s0, %s129
          %s132 = sshll.u32 %s130, 4
          %s133 = int_to_ptr.hbm [resolvable:$true] %s132
          %s134 = sshll.u32 %s126, 4
          %s135 = int_to_ptr.vmem [resolvable:$true] %s134
          %137 = dma.hbm_to_vmem [thread:$0]  %s133, 128, %s135, %s123
        $region24: #{tpu_custom_call.1} parent=19 // pred_fallthru
          _
      $region20: #{tpu_custom_call.1} parent=5 // pred_fallthru
        _
      %p138 = scmp.le.s32.totalorder 1, %s15
      %p139 = scmp.lt.s32.totalorder %s15, 3
      %p140 = pnand %p138, %p139
      %p141 = pneg %p140
      // Predicated region
      $region25: #{tpu_custom_call.1} parent=5 // pred_check
        _
      $region26: #{tpu_custom_call.1} parent=5 // pred_check_branch
        %143 = sbr.rel (%p140) target = $region28
      $region27: #{tpu_custom_call.1} parent=5 // pred_region
        %s144 = ssub.s32 %s15, 1
        %s145 = sand.u32 %s28, 1
        %s146 = scalar_lea.sflag [#allocation3], %s145
        %s147 = sand.u32 %s28, 1
        %s148 = smul.addr %s147, 8
        %s149 = scalar_lea.vmem [#allocation2], %s148
        // Predicated region
        $region29: #{tpu_custom_call.1} parent=27 // pred_check
          %p150 = pneg %p41
        $region30: #{tpu_custom_call.1} parent=27 // pred_check_branch
          %152 = sbr.rel (%p150) target = $region32
        $region31: #{tpu_custom_call.1} parent=27 // pred_region
          %154 = dma.done %s146, 128
        $region32: #{tpu_custom_call.1} parent=27 // pred_fallthru
          _
        // Predicated region
        $region33: #{tpu_custom_call.1} parent=27 // pred_check
          %p155 = pneg %p62
        $region34: #{tpu_custom_call.1} parent=27 // pred_check_branch
          %157 = sbr.rel (%p155) target = $region36
        $region35: #{tpu_custom_call.1} parent=27 // pred_region
          %159 = dma.done [#allocation6], 16
        $region36: #{tpu_custom_call.1} parent=27 // pred_fallthru
          _
        %s160 = sand.u32 %s28, 1
        %s161 = scalar_lea.sflag [#allocation3], %s160
        %s162 = sand.u32 %s28, 1
        %s163 = smul.addr %s162, 8
        %s164 = scalar_lea.vmem [#allocation2], %s163
        %p165 = pneg %p41
        %p166 = pneg %p38
        %p167 = pneg %p62
        %p168 = pneg %p59
        %p169 = pneg %p88
        %p170 = pneg %p85
        %s171 = sand.u32 %s75, 1
        %s172 = scalar_lea.sflag [#allocation4], %s171
        %s173 = sand.u32 %s75, 1
        %s174 = smul.addr %s173, 8
        %s175 = scalar_lea.vmem [#allocation7], %s174
        %v176 = vld [vmem:[%s149] sm:$0xff]
        %vm177 = vcmask 261120
        %v178 = vsel %vm177, %v176, 0.0
        %179 = vadd.xlane.f32.xlu0 %v178
        %v180 = vpop.xlane.xlu0 %179
        %v181 = vrcp.pop 32.0
        %v182 = vmul.f32 32.0, %v181
        %v183 = vsub.f32 1.0, %v182
        %v184 = vmul.f32 %v181, %v183
        %v185 = vadd.f32 %v181, %v184
        %vm186 = vweird.f32 %v181
        %v187 = vsel %vm186, %v181, %v185
        %v188 = vmul.f32 %v180, %v187
        %v189 = vsub.f32 %v176, %v188
        %v190 = vmul.f32 %v189, %v189
        %v191 = vsel %vm177, %v190, 0.0
        %192 = vadd.xlane.f32.xlu0 %v191
        %v193 = vpop.xlane.xlu0 %192
        %v194 = vmul.f32 %v193, %v187
        %v195 = vadd.f32 %v194, 1e-05
        %v196 = vrsqrt.pop %v195
        %v197 = vmul.f32 %v196, %v195
        %v198 = vmul.f32 %v197, %v196
        %v199 = vmul.f32 0.5, %v198
        %v200 = vsub.f32 1.5, %v199
        %v201 = vmul.f32 %v196, %v200
        %vm202 = vweird.f32 %v195
        %vm203 = vweird.f32 %v196
        %vm204 = vmor %vm202, %vm203
        %v205 = vsel %vm204, %v196, %v201
        %v206 = vld [vmem:[#allocation5] sm:$0x1]
        %v207 = vmul.f32 %v189, %v205
        %v209 = vperm.slane %v206, 0
        %v211 = vmul.f32 %v207, %v209
        %212 = vst.msk [vmem:[%s175] sm:$0xff] %vm177, %v211
        %s213 = sand.u32 %s75, 1
        %s214 = scalar_lea.sflag [#allocation4], %s213
        %s215 = sand.u32 %s75, 1
        %s216 = smul.addr %s215, 8
        %s217 = scalar_lea.vmem [#allocation7], %s216
        // Predicated region
        $region37: #{tpu_custom_call.1} parent=27 // pred_check
          %p218 = pneg %p85
        $region38: #{tpu_custom_call.1} parent=27 // pred_check_branch
          %220 = sbr.rel (%p218) target = $region40
        $region39: #{tpu_custom_call.1} parent=27 // pred_region
          %222 = vsyncadd %s214, 0
          %s223 = smul.addr %s20, 8
          %s224 = scalar_lea.hbm %s2, %s223
          %s226 = sshll.u32 %s217, 4
          %s227 = int_to_ptr.vmem [resolvable:$true] %s226
          %s228 = sshll.u32 %s224, 4
          %s229 = int_to_ptr.hbm [resolvable:$true] %s228
          %231 = dma.vmem_to_hbm [thread:$0]  %s227, 128, %s229, %s214
        $region40: #{tpu_custom_call.1} parent=27 // pred_fallthru
          _
      $region28: #{tpu_custom_call.1} parent=5 // pred_fallthru
        _
      %p232 = scmp.le.s32.totalorder 2, %s15
      // Predicated region
      $region41: #{tpu_custom_call.1} parent=5 // pred_check
        %p233 = pneg %p232
      $region42: #{tpu_custom_call.1} parent=5 // pred_check_branch
        %235 = sbr.rel (%p233) target = $region44
      $region43: #{tpu_custom_call.1} parent=5 // pred_region
        %s236 = ssub.s32 %s15, 2
        // Predicated region
        $region45: #{tpu_custom_call.1} parent=43 // pred_check
          %p237 = pneg %p91
        $region46: #{tpu_custom_call.1} parent=43 // pred_check_branch
          %239 = sbr.rel (%p237) target = $region48
        $region47: #{tpu_custom_call.1} parent=43 // pred_region
          %s240 = sand.u32 %s76, 1
          %s241 = scalar_lea.sflag [#allocation4], %s240
          %s242 = sand.u32 %s76, 1
          %s243 = smul.addr %s242, 8
          %s244 = scalar_lea.vmem [#allocation7], %s243
          %246 = dma.done %s241, 128
        $region48: #{tpu_custom_call.1} parent=43 // pred_fallthru
          _
      $region44: #{tpu_custom_call.1} parent=5 // pred_fallthru
        _
    $region6: #{tpu_custom_call.1} parent=1 // loop_footer
      %s19 = sadd.s32 1, %s15
    $region7: #{tpu_custom_call.1} parent=1 // loop_footer_branch
      %14 = sbr.rel target = $region3
    $region8: #{tpu_custom_call.1} parent=1 // loop_exit
      _
    %247 = vsyncpa [#allocation3], 1
    %s248 = scalar_lea.sflag [#allocation3], 1
    %249 = vsyncpa %s248, 1
    %250 = vsyncpa [#allocation6], 1
    %251 = vsyncpa [#allocation4], 1
    %s252 = scalar_lea.sflag [#allocation4], 1
    %253 = vsyncpa %s252, 1

</llo_original>
